<compile_context>
chip_gen: v5e
topology: v5e:2x2
jax: 0.10.0
libtpu: 0.0.40
codegen_flags: <defaults>
</compile_context>

<pallas_src>
import functools
import math

import jax
import jax.numpy as jnp
from jax.experimental import pallas as pl
from jax.experimental.pallas import tpu as pltpu


def _choose_tiling(n):
    """Lane-dense spatial tile TN (multiple of 128, <=512) and padded length Npad."""
    n_pad = ((n + 127) // 128) * 128
    for tn in (512, 256, 128):
        if n_pad % tn == 0:
            return tn, n_pad
    return 128, n_pad  # unreachable (128 always divides n_pad)


# ---------------------------------------------------------------------------
# Stage 1: cmat = Gram(PReLU(conv1(x))) / B
# ---------------------------------------------------------------------------
def _stage1_kernel(x_ref, w1_ref, b1_ref, alpha_ref, cmat_ref, acc_ref,
                   *, inv_b, tile_n, n_valid):
    n = pl.program_id(1)

    @pl.when(n == 0)
    def _():
        acc_ref[...] = jnp.zeros_like(acc_ref)

    # 1x1 conv as a channel matmul: bf16 operands, f32 accumulation on the MXU.
    x_bf = x_ref[0].astype(jnp.bfloat16)                                  # [C, TN]
    g = jnp.dot(w1_ref[...], x_bf,
                preferred_element_type=jnp.float32) + b1_ref[...]         # [C, TN] f32
    g = jnp.where(g >= 0.0, g, alpha_ref[...] * g)                        # PReLU (scalar alpha)
    g_bf = g.astype(jnp.bfloat16)

    if n_valid is not None:
        # Spatial axis was zero-padded to a lane-dense length; padded columns would
        # contribute PReLU(b1) outer products to the Gram matrix, so mask them out.
        lane = jax.lax.broadcasted_iota(jnp.int32, g_bf.shape, 1) + n * tile_n
        g_bf = jnp.where(lane < n_valid, g_bf, jnp.zeros_like(g_bf))

    # Partial Gram matrix: contract the spatial (lane) axis directly — no transpose.
    acc_ref[...] += jax.lax.dot_general(
        g_bf, g_bf,
        dimension_numbers=(((1,), (1,)), ((), ())),
        preferred_element_type=jnp.float32)

    @pl.when(n == pl.num_programs(1) - 1)
    def _():
        # Fold the 1/B scale into the tiny [C, C] result, not the big tensors.
        cmat_ref[0] = acc_ref[...] * inv_b


def _sapca_stage1(x_pad, params, tile_n, n_valid):
    """x_pad [B, C, Npad] f32 -> cmat [B, C, C] f32 (gx is recomputed in stage 2)."""
    B, C, Npad = x_pad.shape
    n_tiles = Npad // tile_n

    w1 = params["w1"].astype(jnp.bfloat16)
    b1 = params["b1"].reshape(C, 1).astype(jnp.float32)
    alpha = jnp.asarray(params["alpha"], jnp.float32).reshape(1, 1)

    kernel = functools.partial(
        _stage1_kernel, inv_b=1.0 / B, tile_n=tile_n,
        n_valid=None if n_valid == Npad else n_valid)

    cmat = pl.pallas_call(
        kernel,
        out_shape=jax.ShapeDtypeStruct((B, C, C), jnp.float32),
        grid_spec=pltpu.PrefetchScalarGridSpec(
            num_scalar_prefetch=0,
            grid=(B, n_tiles),
            in_specs=[
                pl.BlockSpec((1, C, tile_n), lambda b, n: (b, 0, n)),   # x
                pl.BlockSpec((C, C), lambda b, n: (0, 0)),              # W1
                pl.BlockSpec((C, 1), lambda b, n: (0, 0)),              # b1
                pl.BlockSpec((1, 1), lambda b, n: (0, 0)),              # PReLU alpha
            ],
            out_specs=pl.BlockSpec((1, C, C), lambda b, n: (b, 0, 0)),  # resident over n
            scratch_shapes=[pltpu.VMEM((C, C), jnp.float32)],
        ),
        compiler_params=pltpu.CompilerParams(
            dimension_semantics=("parallel", "arbitrary")),
    )(x_pad, w1, b1, alpha)
    return cmat


# ---------------------------------------------------------------------------
# Stage 2: out = x + M @ PReLU(conv1(x)) + b2,   M = W2 @ w_eig  (per batch)
# ---------------------------------------------------------------------------
def _stage2_kernel(x_ref, w1_ref, b1_ref, alpha_ref, m_ref, b2_ref, out_ref):
    x = x_ref[0]                                                           # [C, TN] f32
    g = jnp.dot(w1_ref[...], x.astype(jnp.bfloat16),
                preferred_element_type=jnp.float32) + b1_ref[...]          # [C, TN]
    g = jnp.where(g >= 0.0, g, alpha_ref[...] * g)                         # PReLU
    att = jnp.dot(m_ref[0], g.astype(jnp.bfloat16),
                  preferred_element_type=jnp.float32) + b2_ref[...]        # [C, TN]
    out_ref[0] = x + att                                                   # residual in f32


def _sapca_stage2(x_pad, m_fused, params, tile_n):
    """x_pad [B,C,Npad] f32, m_fused [B,C,C] -> out [B,C,Npad] f32."""
    B, C, Npad = x_pad.shape
    n_tiles = Npad // tile_n

    w1 = params["w1"].astype(jnp.bfloat16)
    b1 = params["b1"].reshape(C, 1).astype(jnp.float32)
    alpha = jnp.asarray(params["alpha"], jnp.float32).reshape(1, 1)
    b2 = params["b2"].reshape(C, 1).astype(jnp.float32)
    m_bf = m_fused.astype(jnp.bfloat16)

    out = pl.pallas_call(
        _stage2_kernel,
        out_shape=jax.ShapeDtypeStruct((B, C, Npad), jnp.float32),
        grid_spec=pltpu.PrefetchScalarGridSpec(
            num_scalar_prefetch=0,
            grid=(B, n_tiles),
            in_specs=[
                pl.BlockSpec((1, C, tile_n), lambda b, n: (b, 0, n)),   # x (residual + conv1)
                pl.BlockSpec((C, C), lambda b, n: (0, 0)),              # W1
                pl.BlockSpec((C, 1), lambda b, n: (0, 0)),              # b1
                pl.BlockSpec((1, 1), lambda b, n: (0, 0)),              # alpha
                pl.BlockSpec((1, C, C), lambda b, n: (b, 0, 0)),        # M = W2 @ w_eig
                pl.BlockSpec((C, 1), lambda b, n: (0, 0)),              # b2
            ],
            out_specs=pl.BlockSpec((1, C, tile_n), lambda b, n: (b, 0, n)),
        ),
        compiler_params=pltpu.CompilerParams(
            dimension_semantics=("parallel", "parallel")),  # independent axes (v7x 2 TCs)
    )(x_pad, w1, b1, alpha, m_bf, b2)
    return out


# ---------------------------------------------------------------------------
# Full block
# ---------------------------------------------------------------------------
def sapca_block(x, params):
    """SAPCABlock forward: x [B, C, H, W] f32 -> [B, C, H, W] f32."""
    B, C, H, W = x.shape
    N = H * W
    C4 = max(C // 4, 1)
    tile_n, n_pad = _choose_tiling(N)

    xf = x.reshape(B, C, N).astype(jnp.float32)
    x_pad = xf if n_pad == N else jnp.pad(xf, ((0, 0), (0, 0), (0, n_pad - N)))

    cmat = _sapca_stage1(x_pad, params, tile_n, N)

    # TODO(synk): symmetric eigendecomposition has no Pallas/Mosaic primitive; it stays
    # in XLA (jnp.linalg.eigh, ascending eigenvalues — same convention as torch.symeig).
    _, eigvec = jnp.linalg.eigh(cmat)
    w_eig = jnp.swapaxes(eigvec[:, :, C - C4:], -1, -2)                 # [B, C4, C]

    # Fold conv2 into the projection: M = W2 @ w_eig (tiny [B, C, C] batched matmul).
    m_fused = jnp.einsum("ok,bkc->boc", params["w2"].astype(jnp.float32), w_eig)

    out = _sapca_stage2(x_pad, m_fused, params, tile_n)
    return out[:, :, :N].reshape(B, C, H, W)


# ---------------------------------------------------------------------------
# Pure-JAX references (mirror the PyTorch forward)
# ---------------------------------------------------------------------------
def _stage1_ref(x_flat, params):
    g = jnp.einsum("oc,bcn->bon", params["w1"], x_flat) + params["b1"][None, :, None]
    g = jnp.where(g >= 0.0, g, params["alpha"] * g)
    cmat = jnp.einsum("bin,bjn->bij", g, g) / x_flat.shape[0]
    return g, cmat


def _stage2_ref(x_flat, gx, w_eig, params):
    y = jnp.einsum("bkc,bcn->bkn", w_eig, gx)
    att = jnp.einsum("ok,bkn->bon", params["w2"], y) + params["b2"][None, :, None]
    return x_flat + att


def sapca_ref(x, params):
    B, C, H, W = x.shape
    C4 = max(C // 4, 1)
    xf = x.reshape(B, C, H * W)
    g, cmat = _stage1_ref(xf, params)
    _, eigvec = jnp.linalg.eigh(cmat)
    w_eig = jnp.swapaxes(eigvec[:, :, C - C4:], -1, -2)
    return _stage2_ref(xf, g, w_eig, params).reshape(B, C, H, W)


def init_params(key, in_channels):
    """PyTorch-like 1x1-conv init; PReLU single parameter initialized to 0.25."""
    C = in_channels
    C4 = max(C // 4, 1)
    ks = jax.random.split(key, 4)

    def u(k, shape, fan_in):
        bound = 1.0 / math.sqrt(fan_in)
        return jax.random.uniform(k, shape, jnp.float32, -bound, bound)

    return {
        "w1": u(ks[0], (C, C), C), "b1": u(ks[1], (C,), C),
        "alpha": jnp.float32(0.25),
        "w2": u(ks[2], (C, C4), C4), "b2": u(ks[3], (C,), C4),
    }


def _validate(x, params):
    """Stage-wise + end-to-end numerical checks against pure-JAX references."""
    B, C, H, W = x.shape
    N = H * W
    C4 = max(C // 4, 1)
    tile_n, n_pad = _choose_tiling(N)

    xf = x.reshape(B, C, N).astype(jnp.float32)
    x_pad = xf if n_pad == N else jnp.pad(xf, ((0, 0), (0, 0), (0, n_pad - N)))

    # cmat (stage 1) against the f32 reference (bf16-operand tolerances).
    cmat_p = _sapca_stage1(x_pad, params, tile_n, N)
    gx_r, cmat_r = _stage1_ref(xf, params)
    assert jnp.allclose(cmat_p, cmat_r, atol=5e-1, rtol=2e-2), "cmat mismatch"

    # Eigenvectors of nearly-degenerate eigenvalues are ill-conditioned (and sign-
    # ambiguous), so the end-to-end check derives w_eig from the (validated) Pallas
    # cmat — the same deterministic eigh the full block uses — and compares the full
    # Pallas output against a pure-JAX stage 2 with that w_eig.
    _, eigvec = jnp.linalg.eigh(cmat_p)
    w_eig = jnp.swapaxes(eigvec[:, :, C - C4:], -1, -2)
    out_ref = _stage2_ref(xf, gx_r, w_eig, params).reshape(B, C, H, W)

    out = jax.block_until_ready(sapca_block(x, params))
    assert out.shape == x.shape
    assert bool(jnp.all(jnp.isfinite(out)))
    assert jnp.allclose(out, out_ref, atol=5e-2, rtol=2e-2), "output mismatch"
    return out


if __name__ == "__main__":
    key = jax.random.PRNGKey(0)
    kx, kx2, kp = jax.random.split(key, 3)

    # Lane-dense case: N = 1024 -> two 512-lane spatial tiles per batch; C // 4 = 2.
    B, C, H, W = 2, 8, 32, 32
    params = init_params(kp, C)
    x = jax.random.normal(kx, (B, C, H, W), jnp.float32)
    _validate(x, params)

    # Non-lane-dense case: N = 196 -> padded to 256 with masked Gram accumulation.
    x2 = jax.random.normal(kx2, (B, C, 14, 14), jnp.float32)
    _validate(x2, params)

    print("KERNEL_OK")
</pallas_src>

<mosaic_0001>
module attributes {stable_mosaic.version = 11 : i64} {
  func.func @_stage1_kernel(%arg0: i32, %arg1: i32, %arg2: memref<1x8x512xf32, #tpu.memory_space<vmem>>, %arg3: memref<8x8xbf16, #tpu.memory_space<vmem>>, %arg4: memref<8x1xf32, #tpu.memory_space<vmem>>, %arg5: memref<1x1xf32, #tpu.memory_space<vmem>>, %arg6: memref<1x8x8xf32, #tpu.memory_space<vmem>>, %arg7: memref<8x8xf32, #tpu.memory_space<vmem>>) attributes {dimension_semantics = [#tpu.dimension_semantics<parallel>, #tpu.dimension_semantics<arbitrary>], iteration_bounds = array<i64: 2, 2>, scalar_prefetch = 0 : i64, scratch_operands = 1 : i64, tpu.core_type = #tpu.core_type<tc>, window_params = [{transform_indices = @transform_0, window_bounds = array<i64: 1, 8, 512>}, {pipeline_mode = #tpu.pipeline_mode<synchronous>, transform_indices = @transform_1, window_bounds = array<i64: 8, 8>}, {pipeline_mode = #tpu.pipeline_mode<synchronous>, transform_indices = @transform_2, window_bounds = array<i64: 8, 1>}, {pipeline_mode = #tpu.pipeline_mode<synchronous>, transform_indices = @transform_3, window_bounds = array<i64: 1, 1>}, {transform_indices = @transform_4, window_bounds = array<i64: 1, 8, 8>}]} {
    %c0_i32 = arith.constant 0 : i32
    %0 = arith.cmpi eq, %arg1, %c0_i32 : i32
    %1 = arith.extui %0 : i1 to i32
    %c0_i32_0 = arith.constant 0 : i32
    %2 = arith.cmpi ne, %1, %c0_i32_0 : i32
    scf.if %2 {
      %cst_16 = arith.constant 0.000000e+00 : f32
      %25 = vector.broadcast %cst_16 : f32 to vector<8x8xf32>
      %c0_17 = arith.constant 0 : index
      %c0_18 = arith.constant 0 : index
      %26 = vector.load %arg7[%c0_17, %c0_18] : memref<8x8xf32, #tpu.memory_space<vmem>>, vector<8x8xf32>
      tpu.vector_store %arg7[%c0_17, %c0_18], %25 {strides = array<i32>} : memref<8x8xf32, #tpu.memory_space<vmem>>, vector<8x8xf32>,
    } else {
    }
    %c0 = arith.constant 0 : index
    %c0_1 = arith.constant 0 : index
    %c0_2 = arith.constant 0 : index
    %3 = vector.load %arg2[%c0, %c0_1, %c0_2] : memref<1x8x512xf32, #tpu.memory_space<vmem>>, vector<1x8x512xf32>
    %4 = vector.shape_cast %3 : vector<1x8x512xf32> to vector<8x512xf32>
    %5 = arith.truncf %4 : vector<8x512xf32> to vector<8x512xbf16>
    %c0_3 = arith.constant 0 : index
    %c0_4 = arith.constant 0 : index
    %6 = vector.load %arg3[%c0_3, %c0_4] : memref<8x8xbf16, #tpu.memory_space<vmem>>, vector<8x8xbf16>
    %cst = arith.constant dense<0.000000e+00> : vector<8x512xf32>
    %7 = tpu.matmul %6, %5, %cst {dimension_numbers = #tpu.dot_dimension_numbers<[1], [0], [0], [1], [0, 0, 1, 1], [], []>} : vector<8x8xbf16>, vector<8x512xbf16>, vector<8x512xf32> -> vector<8x512xf32>
    %c0_5 = arith.constant 0 : index
    %c0_6 = arith.constant 0 : index
    %8 = vector.load %arg4[%c0_5, %c0_6] : memref<8x1xf32, #tpu.memory_space<vmem>>, vector<8x1xf32>
    %9 = vector.broadcast %8 : vector<8x1xf32> to vector<8x512xf32>
    %10 = arith.addf %7, %9 : vector<8x512xf32>
    %cst_7 = arith.constant 0.000000e+00 : f32
    %11 = vector.broadcast %cst_7 : f32 to vector<8x512xf32>
    %12 = arith.cmpf oge, %10, %11 : vector<8x512xf32>
    %c0_8 = arith.constant 0 : index
    %c0_9 = arith.constant 0 : index
    %13 = vector.load %arg5[%c0_8, %c0_9] : memref<1x1xf32, #tpu.memory_space<vmem>>, vector<1x1xf32>
    %14 = vector.broadcast %13 : vector<1x1xf32> to vector<8x512xf32>
    %15 = arith.mulf %14, %10 : vector<8x512xf32>
    %16 = arith.select %12, %10, %15 : vector<8x512xi1>, vector<8x512xf32>
    %17 = arith.truncf %16 : vector<8x512xf32> to vector<8x512xbf16>
    %c0_10 = arith.constant 0 : index
    %c0_11 = arith.constant 0 : index
    %18 = vector.load %arg7[%c0_10, %c0_11] : memref<8x8xf32, #tpu.memory_space<vmem>>, vector<8x8xf32>
    %cst_12 = arith.constant dense<0.000000e+00> : vector<8x8xf32>
    %19 = tpu.matmul %17, %17, %cst_12 {dimension_numbers = #tpu.dot_dimension_numbers<[1], [1], [0], [0], [0, 0, 1, 0], [], []>} : vector<8x512xbf16>, vector<8x512xbf16>, vector<8x8xf32> -> vector<8x8xf32>
    %20 = arith.addf %18, %19 : vector<8x8xf32>
    %c0_13 = arith.constant 0 : index
    %c0_14 = arith.constant 0 : index
    %21 = vector.load %arg7[%c0_13, %c0_14] : memref<8x8xf32, #tpu.memory_space<vmem>>, vector<8x8xf32>
    tpu.vector_store %arg7[%c0_13, %c0_14], %20 {strides = array<i32>} : memref<8x8xf32, #tpu.memory_space<vmem>>, vector<8x8xf32>,
    %c1_i32 = arith.constant 1 : i32
    %22 = arith.cmpi eq, %arg1, %c1_i32 : i32
    %23 = arith.extui %22 : i1 to i32
    %c0_i32_15 = arith.constant 0 : i32
    %24 = arith.cmpi ne, %23, %c0_i32_15 : i32
    scf.if %24 {
      %c0_16 = arith.constant 0 : index
      %c0_17 = arith.constant 0 : index
      %25 = vector.load %arg7[%c0_16, %c0_17] : memref<8x8xf32, #tpu.memory_space<vmem>>, vector<8x8xf32>
      %cst_18 = arith.constant 5.000000e-01 : f32
      %26 = vector.broadcast %cst_18 : f32 to vector<8x8xf32>
      %27 = arith.mulf %25, %26 : vector<8x8xf32>
      %c0_19 = arith.constant 0 : index
      %c0_20 = arith.constant 0 : index
      %c0_21 = arith.constant 0 : index
      %28 = vector.load %arg6[%c0_19, %c0_20, %c0_21] : memref<1x8x8xf32, #tpu.memory_space<vmem>>, vector<1x8x8xf32>
      %29 = vector.shape_cast %28 : vector<1x8x8xf32> to vector<8x8xf32>
      %30 = vector.shape_cast %27 : vector<8x8xf32> to vector<1x8x8xf32>
      tpu.vector_store %arg6[%c0_19, %c0_20, %c0_21], %30 {strides = array<i32>} : memref<1x8x8xf32, #tpu.memory_space<vmem>>, vector<1x8x8xf32>,
    } else {
    }
    return
  }
  func.func @transform_0(%arg0: i32, %arg1: i32) -> (i32, i32, i32) {
    %c0_i32 = arith.constant 0 : i32
    %c0_i32_0 = arith.constant 0 : i32
    return %arg0, %c0_i32, %arg1 : i32, i32, i32
  }
  func.func @transform_1(%arg0: i32, %arg1: i32) -> (i32, i32) {
    %c0_i32 = arith.constant 0 : i32
    %c0_i32_0 = arith.constant 0 : i32
    %c0_i32_1 = arith.constant 0 : i32
    return %c0_i32, %c0_i32_0 : i32, i32
  }
  func.func @transform_2(%arg0: i32, %arg1: i32) -> (i32, i32) {
    %c0_i32 = arith.constant 0 : i32
    %c0_i32_0 = arith.constant 0 : i32
    %c0_i32_1 = arith.constant 0 : i32
    return %c0_i32, %c0_i32_0 : i32, i32
  }
  func.func @transform_3(%arg0: i32, %arg1: i32) -> (i32, i32) {
    %c0_i32 = arith.constant 0 : i32
    %c0_i32_0 = arith.constant 0 : i32
    %c0_i32_1 = arith.constant 0 : i32
    return %c0_i32, %c0_i32_0 : i32, i32
  }
  func.func @transform_4(%arg0: i32, %arg1: i32) -> (i32, i32, i32) {
    %c0_i32 = arith.constant 0 : i32
    %c0_i32_0 = arith.constant 0 : i32
    %c0_i32_1 = arith.constant 0 : i32
    return %arg0, %c0_i32, %c0_i32_0 : i32, i32, i32
  }
}

</mosaic_0001>

<llo_original>
// kernel: tpu_custom_call.1
$region0: #{tpu_custom_call.1}
  #allocation0 [shape = 'u32[]', space=smem, size = 0x4, offset = 0x4, fixed_abs, tag = 'smem constant byte address 0x4 - core index']
  #allocation1 [shape = 'u32[72,128]{1,0:T(1,128)}', space=vmem, size = 0x9000, scoped, tag = 'internal scratch']
  #allocation2 [shape = 'f32[8,8]{1,0:T(8,128)}', space=vmem, size = 0x1000, scoped, tag = 'scratch operand']
  #allocation3 [shape = 'f32[1,1]{1,0:T(1,128)S(1)}', space=vmem, size = 0x200, scoped, tag = 'scoped memory for tpu_custom_call.1']
  %s0 = inlined_call_operand.hbm [shape: f32[2,8,1024], index: 0, kind: input, shape index: {}]
  %s1 = inlined_call_operand.vmem [shape: bf16[8,8], index: 1, kind: input, shape index: {}]
  %s2 = inlined_call_operand.vmem [shape: f32[8,1], index: 2, kind: input, shape index: {}]
  %s3 = inlined_call_operand.<no memory space> [shape: f32[1,1], index: 3, kind: input, shape index: {}]
  %s4 = inlined_call_operand.hbm [shape: f32[2,8,8], index: 4, kind: output, shape index: {}]
  %s5 = sld [smem:[#allocation0]]
  $region61: #{tpu_custom_call.1} parent=0
    _
  %s7 = ssub.s32 1, %s5
  %s8 = scalar_select 0, %s7, %s5
  %v9 = vstv %s3
  %10 = vst [vmem:[#allocation3] sm:$0x1] %v9
  $region1: #{tpu_custom_call.1} parent=0
    #allocation4 [shape = 'u8[32768]{0}', space=vmem, size = 0x8000, scoped, tag = 'input window, operand 0']
    #allocation5 [shape = 's32[2]{0}', space=sflag, size = 0x8, scoped, tag = 'scoped memory for tpu_custom_call.1']
    #allocation6 [shape = 's32[2]{0}', space=sflag, size = 0x8, scoped, tag = 'scoped memory for tpu_custom_call.1']
    #allocation7 [shape = 'u8[8192]{0}', space=vmem, size = 0x2000, scoped, tag = 'output window, operand 0']
    %11 = vsyncpa [#allocation5], 0
    %s12 = scalar_lea.sflag [#allocation5], 1
    %13 = vsyncpa %s12, 0
    %14 = vsyncpa [#allocation6], 0
    %s15 = scalar_lea.sflag [#allocation6], 1
    %16 = vsyncpa %s15, 0
    loop: start=0, step=1, limit=6
    $region2: #{tpu_custom_call.1} parent=1 // loop_pre_header
      _
    $region3: #{tpu_custom_call.1} parent=1 // loop_header
      %s18 = sphi 0, %s22
      %p19 = scmp.ge.s32.totalorder %s18, 6
      %s25 = sphi 0, %s37
      %s26 = sphi 0, %s33
      %s27 = sphi 0, %s25
      %s28 = sphi 0, %s26
      %s29 = sphi 0, %s27
      %s30 = sphi 0, %s28
      %s42 = sphi 0, %s44
      %s45 = sphi 0, %s42
      %s46 = sphi 0, %s45
      %s62 = sphi 0, %s46
      %s66 = sphi 0, %s66
      %s68 = sphi 0, %s66
      %s69 = sphi 0, %s68
      %s83 = sphi 0, %s69
      %s87 = sphi 0, %s87
      %s89 = sphi 0, %s87
      %s90 = sphi 0, %s89
      %s104 = sphi 0, %s90
      %s108 = sphi 0, %s108
      %s110 = sphi 0, %s108
      %s111 = sphi 0, %s110
      %s125 = sphi 0, %s111
      %s131 = sphi 0, %s133
      %s134 = sphi 0, %s131
      %s135 = sphi 0, %s134
      %s151 = sphi 0, %s135
    $region4: #{tpu_custom_call.1} parent=1 // loop_header_branch
      %21 = sbr.rel (%p19) target = $region8
    $region5: #{tpu_custom_call.1} parent=1 // loop_body
      %s23 = ssub.s32 %s18, 1
      %s24 = ssub.s32 %s18, 2
      %s31 = sadd.s32 1, %s26
      %p32 = scmp.ge.s32.totalorder %s31, 2
      %s33 = scalar_select %p32, 0, %s31
      %s34 = sadd.s32 1, %s25
      %s35 = scalar_select %p32, %s34, %s25
      %p36 = scmp.ge.s32.totalorder %s35, 2
      %s37 = scalar_select %p36, 0, %s35
      %s38 = ssub.s32 %s25, %s37
      %s39 = ssub.s32 %s26, %s33
      %s40 = sor.u32 %s38, %s39
      %p41 = scmp.eq.s32.totalorder %s40, 0
      %s43 = sadd.s32 %s42, 1
      %s44 = scalar_select %p41, %s42, %s43
      %p47 = pneg %p41
      %p48 = scmp.eq.s32.totalorder %s18, 3
      %p49 = por %p47, %p48
      %p50 = scmp.ne.s32.totalorder %s42, %s45
      %p51 = scmp.eq.s32.totalorder %s18, 0
      %p52 = por %p50, %p51
      %p53 = scmp.ne.s32.totalorder %s42, %s45
      %p54 = scmp.eq.s32.totalorder %s23, 3
      %p55 = por %p53, %p54
      %p56 = scmp.ne.s32.totalorder %s45, %s46
      %p57 = scmp.eq.s32.totalorder %s23, 0
      %p58 = por %p56, %p57
      %p59 = scmp.ne.s32.totalorder %s45, %s46
      %p60 = scmp.eq.s32.totalorder %s24, 3
      %p61 = por %p59, %p60
      %p63 = scmp.ne.s32.totalorder %s46, %s62
      %p64 = scmp.eq.s32.totalorder %s24, 0
      %p65 = por %p63, %p64
      %s67 = sadd.s32 %s66, 1
      %p70 = scmp.eq.s32.totalorder %s18, 3
      %p71 = scmp.ne.s32.totalorder %s66, %s68
      %p72 = scmp.eq.s32.totalorder %s18, 0
      %p73 = por %p71, %p72
      %p74 = scmp.ne.s32.totalorder %s66, %s68
      %p75 = scmp.eq.s32.totalorder %s23, 3
      %p76 = por %p74, %p75
      %p77 = scmp.ne.s32.totalorder %s68, %s69
      %p78 = scmp.eq.s32.totalorder %s23, 0
      %p79 = por %p77, %p78
      %p80 = scmp.ne.s32.totalorder %s68, %s69
      %p81 = scmp.eq.s32.totalorder %s24, 3
      %p82 = por %p80, %p81
      %p84 = scmp.ne.s32.totalorder %s69, %s83
      %p85 = scmp.eq.s32.totalorder %s24, 0
      %p86 = por %p84, %p85
      %s88 = sadd.s32 %s87, 1
      %p91 = scmp.eq.s32.totalorder %s18, 3
      %p92 = scmp.ne.s32.totalorder %s87, %s89
      %p93 = scmp.eq.s32.totalorder %s18, 0
      %p94 = por %p92, %p93
      %p95 = scmp.ne.s32.totalorder %s87, %s89
      %p96 = scmp.eq.s32.totalorder %s23, 3
      %p97 = por %p95, %p96
      %p98 = scmp.ne.s32.totalorder %s89, %s90
      %p99 = scmp.eq.s32.totalorder %s23, 0
      %p100 = por %p98, %p99
      %p101 = scmp.ne.s32.totalorder %s89, %s90
      %p102 = scmp.eq.s32.totalorder %s24, 3
      %p103 = por %p101, %p102
      %p105 = scmp.ne.s32.totalorder %s90, %s104
      %p106 = scmp.eq.s32.totalorder %s24, 0
      %p107 = por %p105, %p106
      %s109 = sadd.s32 %s108, 1
      %p112 = scmp.eq.s32.totalorder %s18, 3
      %p113 = scmp.ne.s32.totalorder %s108, %s110
      %p114 = scmp.eq.s32.totalorder %s18, 0
      %p115 = por %p113, %p114
      %p116 = scmp.ne.s32.totalorder %s108, %s110
      %p117 = scmp.eq.s32.totalorder %s23, 3
      %p118 = por %p116, %p117
      %p119 = scmp.ne.s32.totalorder %s110, %s111
      %p120 = scmp.eq.s32.totalorder %s23, 0
      %p121 = por %p119, %p120
      %p122 = scmp.ne.s32.totalorder %s110, %s111
      %p123 = scmp.eq.s32.totalorder %s24, 3
      %p124 = por %p122, %p123
      %p126 = scmp.ne.s32.totalorder %s111, %s125
      %p127 = scmp.eq.s32.totalorder %s24, 0
      %p128 = por %p126, %p127
      %s129 = ssub.s32 %s25, %s37
      %p130 = scmp.eq.s32.totalorder %s129, 0
      %s132 = sadd.s32 %s131, 1
      %s133 = scalar_select %p130, %s131, %s132
      %p136 = pneg %p130
      %p137 = scmp.eq.s32.totalorder %s18, 3
      %p138 = por %p136, %p137
      %p139 = scmp.ne.s32.totalorder %s131, %s134
      %p140 = scmp.eq.s32.totalorder %s18, 0
      %p141 = por %p139, %p140
      %p142 = scmp.ne.s32.totalorder %s131, %s134
      %p143 = scmp.eq.s32.totalorder %s23, 3
      %p144 = por %p142, %p143
      %p145 = scmp.ne.s32.totalorder %s134, %s135
      %p146 = scmp.eq.s32.totalorder %s23, 0
      %p147 = por %p145, %p146
      %p148 = scmp.ne.s32.totalorder %s134, %s135
      %p149 = scmp.eq.s32.totalorder %s24, 3
      %p150 = por %p148, %p149
      %p152 = scmp.ne.s32.totalorder %s135, %s151
      %p153 = scmp.eq.s32.totalorder %s24, 0
      %p154 = por %p152, %p153
      %p155 = scmp.le.s32.totalorder 1, %s18
      %p156 = scmp.lt.s32.totalorder %s18, 5
      %p157 = pnand %p155, %p156
      %p158 = pneg %p157
      // Predicated region
      $region9: #{tpu_custom_call.1} parent=5 // pred_check
        _
      $region10: #{tpu_custom_call.1} parent=5 // pred_check_branch
        %160 = sbr.rel (%p157) target = $region12
      $region11: #{tpu_custom_call.1} parent=5 // pred_region
        %s161 = ssub.s32 %s18, 1
        // Predicated region
        $region13: #{tpu_custom_call.1} parent=11 // pred_check
          %p162 = pneg %p79
        $region14: #{tpu_custom_call.1} parent=11 // pred_check_branch
          %164 = sbr.rel (%p162) target = $region16
        $region15: #{tpu_custom_call.1} parent=11 // pred_region
          _
        $region16: #{tpu_custom_call.1} parent=11 // pred_fallthru
          _
        // Predicated region
        $region17: #{tpu_custom_call.1} parent=11 // pred_check
          %p165 = pneg %p100
        $region18: #{tpu_custom_call.1} parent=11 // pred_check_branch
          %167 = sbr.rel (%p165) target = $region20
        $region19: #{tpu_custom_call.1} parent=11 // pred_region
          _
        $region20: #{tpu_custom_call.1} parent=11 // pred_fallthru
          _
        // Predicated region
        $region21: #{tpu_custom_call.1} parent=11 // pred_check
          %p168 = pneg %p121
        $region22: #{tpu_custom_call.1} parent=11 // pred_check_branch
          %170 = sbr.rel (%p168) target = $region24
        $region23: #{tpu_custom_call.1} parent=11 // pred_region
          _
        $region24: #{tpu_custom_call.1} parent=11 // pred_fallthru
          _
      $region12: #{tpu_custom_call.1} parent=5 // pred_fallthru
        _
      %p171 = scmp.lt.s32.totalorder %s18, 4
      // Predicated region
      $region25: #{tpu_custom_call.1} parent=5 // pred_check
        %p172 = pneg %p171
      $region26: #{tpu_custom_call.1} parent=5 // pred_check_branch
        %174 = sbr.rel (%p172) target = $region28
      $region27: #{tpu_custom_call.1} parent=5 // pred_region
        // Predicated region
        $region29: #{tpu_custom_call.1} parent=27 // pred_check
          %p175 = pneg %p52
        $region30: #{tpu_custom_call.1} parent=27 // pred_check_branch
          %177 = sbr.rel (%p175) target = $region32
        $region31: #{tpu_custom_call.1} parent=27 // pred_region
          %s178 = sand.u32 %s42, 1
          %s179 = scalar_lea.sflag [#allocation5], %s178
          %s180 = sand.u32 %s42, 1
          %s181 = smul.addr %s180, 32
          %s182 = scalar_lea.vmem [#allocation4], %s181
          %s183 = smul.u32 4, %s26
          %185 = vsyncadd %s179, 0
          %s186 = smul.addr %s25, 8
          %s187 = sadd.s32 %s183, %s186
          %s188 = smul.addr %s187, 8
          %s189 = scalar_lea.hbm %s0, %s188
          %s191 = sshll.u32 %s189, 4
          %s192 = int_to_ptr.hbm [resolvable:$true] %s191
          %s193 = sshll.u32 %s182, 4
          %s194 = int_to_ptr.vmem [resolvable:$true] %s193
          %196 = dma.hbm_to_vmem [thread:$0]  %s192, 512, %s194, %s179
        $region32: #{tpu_custom_call.1} parent=27 // pred_fallthru
          _
      $region28: #{tpu_custom_call.1} parent=5 // pred_fallthru
        _
      %p197 = scmp.le.s32.totalorder 1, %s18
      %p198 = scmp.lt.s32.totalorder %s18, 5
      %p199 = pnand %p197, %p198
      %p200 = pneg %p199
      // Predicated region
      $region33: #{tpu_custom_call.1} parent=5 // pred_check
        _
      $region34: #{tpu_custom_call.1} parent=5 // pred_check_branch
        %202 = sbr.rel (%p199) target = $region36
      $region35: #{tpu_custom_call.1} parent=5 // pred_region
        %s203 = ssub.s32 %s18, 1
        %s204 = sand.u32 %s45, 1
        %s205 = scalar_lea.sflag [#allocation5], %s204
        %s206 = sand.u32 %s45, 1
        %s207 = smul.addr %s206, 32
        %s208 = scalar_lea.vmem [#allocation4], %s207
        // Predicated region
        $region37: #{tpu_custom_call.1} parent=35 // pred_check
          %p209 = pneg %p58
        $region38: #{tpu_custom_call.1} parent=35 // pred_check_branch
          %211 = sbr.rel (%p209) target = $region40
        $region39: #{tpu_custom_call.1} parent=35 // pred_region
          %213 = dma.done %s205, 512
        $region40: #{tpu_custom_call.1} parent=35 // pred_fallthru
          _
        %s214 = sand.u32 %s45, 1
        %s215 = scalar_lea.sflag [#allocation5], %s214
        %s216 = sand.u32 %s45, 1
        %s217 = smul.addr %s216, 32
        %s218 = scalar_lea.vmem [#allocation4], %s217
        %p219 = pneg %p58
        %p220 = pneg %p55
        %p221 = pneg %p79
        %p222 = pneg %p76
        %p223 = pneg %p100
        %p224 = pneg %p97
        %p225 = pneg %p121
        %p226 = pneg %p118
        %p227 = pneg %p147
        %p228 = pneg %p144
        %s229 = sand.u32 %s134, 1
        %s230 = scalar_lea.sflag [#allocation6], %s229
        %s231 = sand.u32 %s134, 1
        %s232 = smul.addr %s231, 8
        %s233 = scalar_lea.vmem [#allocation7], %s232
        %s234 = smul.u32 4, %s28
        %p236 = scmp.eq.s32.totalorder %s28, 0
        // Predicated region
        $region41: #{tpu_custom_call.1} parent=35 // pred_check
          %p237 = pneg %p236
        $region42: #{tpu_custom_call.1} parent=35 // pred_check_branch
          %239 = sbr.rel (%p237) target = $region44
        $region43: #{tpu_custom_call.1} parent=35 // pred_region
          %vm240 = vcmask 64512
          %241 = vst.msk [vmem:[#allocation2] sm:$0xff] %vm240, 0.0
        $region44: #{tpu_custom_call.1} parent=35 // pred_fallthru
          _
        %v242 = vld [vmem:[%s208] sm:$0xff]
        %v243 = vld [vmem:[%s208 + $0x8] sm:$0xff]
        %v244 = vld [vmem:[%s208 + $0x10] sm:$0xff]
        %v245 = vld [vmem:[%s208 + $0x18] sm:$0xff]
        %v246 = vpack.c.bf16 %v242, %v242
        %v247 = vpack.c.bf16 %v243, %v243
        %v248 = vpack.c.bf16 %v244, %v244
        %v249 = vpack.c.bf16 %v245, %v245
        %v250 = vld [vmem:[%s1] sm:$0xf]
        %v251 = vld [vmem:[%s2] sm:$0xff]
        %253 = vset.pattern.permute.xlu0 0
        %254 = vperm.xlu0 %253, %v251
        %v255 = vpop.permute.xlu0 %254
        %vm257 = vcmask 64512
        %v259 = vsel %vm257, %v250, 0
        %vm261 = vcmask 1043456
        %v263 = vsel %vm261, %v246, 0
        %v266 = vsel %vm261, %v247, 0
        %v269 = vsel %vm261, %v248, 0
        %v272 = vsel %vm261, %v249, 0
        %274 = vmatpush.bf16.msra.mxu0 0
        %275 = vmatpush.bf16.msra.mxu0 0
        %276 = vmatpush.bf16.msra.mxu0 0
        %277 = vmatpush.bf16.msra.mxu0 0
        %278 = vmatpush.bf16.msra.mxu0 0
        %279 = vmatpush.bf16.msra.mxu0 0
        %280 = vmatpush.bf16.msra.mxu0 0
        %281 = vmatpush.bf16.msra.mxu0 %v263
        %282 = vmatmul.bf16.gmra.mxu0 %v259
        %v283 = vpop.f32.mrf.mxu0
        %v284 = vadd.f32 %v255, %v283
        %v285 = vpop.f32.mrf.mxu0
        %286 = vdwg.mxu0
        %287 = vmatpush.bf16.msra.mxu0 0
        %288 = vmatpush.bf16.msra.mxu0 0
        %289 = vmatpush.bf16.msra.mxu0 0
        %290 = vmatpush.bf16.msra.mxu0 0
        %291 = vmatpush.bf16.msra.mxu0 0
        %292 = vmatpush.bf16.msra.mxu0 0
        %293 = vmatpush.bf16.msra.mxu0 0
        %294 = vmatpush.bf16.msra.mxu0 %v266
        %295 = vmatmul.bf16.gmra.mxu0 %v259
        %v296 = vpop.f32.mrf.mxu0
        %v297 = vadd.f32 %v255, %v296
        %v298 = vpop.f32.mrf.mxu0
        %299 = vdwg.mxu0
        %300 = vmatpush.bf16.msra.mxu0 0
        %301 = vmatpush.bf16.msra.mxu0 0
        %302 = vmatpush.bf16.msra.mxu0 0
        %303 = vmatpush.bf16.msra.mxu0 0
        %304 = vmatpush.bf16.msra.mxu0 0
        %305 = vmatpush.bf16.msra.mxu0 0
        %306 = vmatpush.bf16.msra.mxu0 0
        %307 = vmatpush.bf16.msra.mxu0 %v269
        %308 = vmatmul.bf16.gmra.mxu0 %v259
        %v309 = vpop.f32.mrf.mxu0
        %v310 = vadd.f32 %v255, %v309
        %v311 = vpop.f32.mrf.mxu0
        %312 = vdwg.mxu0
        %313 = vmatpush.bf16.msra.mxu0 0
        %314 = vmatpush.bf16.msra.mxu0 0
        %315 = vmatpush.bf16.msra.mxu0 0
        %316 = vmatpush.bf16.msra.mxu0 0
        %317 = vmatpush.bf16.msra.mxu0 0
        %318 = vmatpush.bf16.msra.mxu0 0
        %319 = vmatpush.bf16.msra.mxu0 0
        %320 = vmatpush.bf16.msra.mxu0 %v272
        %321 = vmatmul.bf16.gmra.mxu0 %v259
        %v322 = vpop.f32.mrf.mxu0
        %v323 = vadd.f32 %v255, %v322
        %v324 = vpop.f32.mrf.mxu0
        %325 = vdwg.mxu0
        %vm326 = vcmp.ge.f32.partialorder %v284, 0.0
        %vm327 = vcmp.ge.f32.partialorder %v297, 0.0
        %vm328 = vcmp.ge.f32.partialorder %v310, 0.0
        %vm329 = vcmp.ge.f32.partialorder %v323, 0.0
        %v330 = vld [vmem:[#allocation3] sm:$0x1]
        %v332 = vperm.slane %v330, 0
        %333 = vset.pattern.permute.xlu0 0
        %334 = vperm.xlu0 %333, %v332
        %v335 = vpop.permute.xlu0 %334
        %v337 = vmul.f32 %v335, %v284
        %v338 = vmul.f32 %v335, %v297
        %v339 = vmul.f32 %v335, %v310
        %v340 = vmul.f32 %v335, %v323
        %v341 = vsel %vm326, %v284, %v337
        %v342 = vsel %vm327, %v297, %v338
        %v343 = vsel %vm328, %v310, %v339
        %v344 = vsel %vm329, %v323, %v340
        %v345 = vpack.c.bf16 %v341, %v341
        %v346 = vpack.c.bf16 %v342, %v342
        %v347 = vpack.c.bf16 %v343, %v343
        %v348 = vpack.c.bf16 %v344, %v344
        %v349 = vld [vmem:[#allocation2] sm:$0xff]
        %350 = vmatpush.bf16.xpose.msra.mxu0 0
        %351 = vmatpush.bf16.xpose.msra.mxu0 0
        %352 = vmatpush.bf16.xpose.msra.mxu0 0
        %353 = vmatpush.bf16.xpose.msra.mxu0 0
        %354 = vmatpush.bf16.xpose.msra.mxu0 0
        %355 = vmatpush.bf16.xpose.msra.mxu0 0
        %356 = vmatpush.bf16.xpose.msra.mxu0 0
        %357 = vmatpush.bf16.xpose.msra.mxu0 %v345
        %358 = vmatmul.bf16.gmra.mxu0 %v345
        %v359 = vpop.f32.mrf.mxu0
        %v360 = vadd.f32 0.0, %v359
        %v361 = vpop.f32.mrf.mxu0
        %362 = vdwg.mxu0
        %363 = vmatpush.bf16.xpose.msra.mxu0 0
        %364 = vmatpush.bf16.xpose.msra.mxu0 0
        %365 = vmatpush.bf16.xpose.msra.mxu0 0
        %366 = vmatpush.bf16.xpose.msra.mxu0 0
        %367 = vmatpush.bf16.xpose.msra.mxu0 0
        %368 = vmatpush.bf16.xpose.msra.mxu0 0
        %369 = vmatpush.bf16.xpose.msra.mxu0 0
        %370 = vmatpush.bf16.xpose.msra.mxu0 %v346
        %371 = vmatmul.bf16.gmra.mxu0 %v346
        %v372 = vpop.f32.mrf.mxu0
        %v373 = vadd.f32 %v360, %v372
        %v374 = vpop.f32.mrf.mxu0
        %375 = vdwg.mxu0
        %376 = vmatpush.bf16.xpose.msra.mxu0 0
        %377 = vmatpush.bf16.xpose.msra.mxu0 0
        %378 = vmatpush.bf16.xpose.msra.mxu0 0
        %379 = vmatpush.bf16.xpose.msra.mxu0 0
        %380 = vmatpush.bf16.xpose.msra.mxu0 0
        %381 = vmatpush.bf16.xpose.msra.mxu0 0
        %382 = vmatpush.bf16.xpose.msra.mxu0 0
        %383 = vmatpush.bf16.xpose.msra.mxu0 %v347
        %384 = vmatmul.bf16.gmra.mxu0 %v347
        %v385 = vpop.f32.mrf.mxu0
        %v386 = vadd.f32 %v373, %v385
        %v387 = vpop.f32.mrf.mxu0
        %388 = vdwg.mxu0
        %389 = vmatpush.bf16.xpose.msra.mxu0 0
        %390 = vmatpush.bf16.xpose.msra.mxu0 0
        %391 = vmatpush.bf16.xpose.msra.mxu0 0
        %392 = vmatpush.bf16.xpose.msra.mxu0 0
        %393 = vmatpush.bf16.xpose.msra.mxu0 0
        %394 = vmatpush.bf16.xpose.msra.mxu0 0
        %395 = vmatpush.bf16.xpose.msra.mxu0 0
        %396 = vmatpush.bf16.xpose.msra.mxu0 %v348
        %397 = vmatmul.bf16.gmra.mxu0 %v348
        %v398 = vpop.f32.mrf.mxu0
        %v399 = vadd.f32 %v386, %v398
        %v400 = vpop.f32.mrf.mxu0
        %401 = vdwg.mxu0
        %v402 = vadd.f32 %v349, %v399
        %403 = vst.msk [vmem:[#allocation2] sm:$0xff] %vm257, %v402
        %p404 = scmp.eq.s32.totalorder %s28, 1
        // Predicated region
        $region45: #{tpu_custom_call.1} parent=35 // pred_check
          %p405 = pneg %p404
        $region46: #{tpu_custom_call.1} parent=35 // pred_check_branch
          %407 = sbr.rel (%p405) target = $region48
        $region47: #{tpu_custom_call.1} parent=35 // pred_region
          %v408 = vld [vmem:[#allocation2] sm:$0xff]
          %v409 = vmul.f32 %v408, 0.5
          %410 = vst.msk [vmem:[%s233] sm:$0xff] %vm257, %v409
        $region48: #{tpu_custom_call.1} parent=35 // pred_fallthru
          _
        %s411 = sand.u32 %s134, 1
        %s412 = scalar_lea.sflag [#allocation6], %s411
        %s413 = sand.u32 %s134, 1
        %s414 = smul.addr %s413, 8
        %s415 = scalar_lea.vmem [#allocation7], %s414
        // Predicated region
        $region49: #{tpu_custom_call.1} parent=35 // pred_check
          %p416 = pneg %p144
        $region50: #{tpu_custom_call.1} parent=35 // pred_check_branch
          %418 = sbr.rel (%p416) target = $region52
        $region51: #{tpu_custom_call.1} parent=35 // pred_region
          %420 = vsyncadd %s412, 0
          %s421 = smul.addr %s27, 8
          %s422 = scalar_lea.hbm %s4, %s421
          %s424 = sshll.u32 %s415, 4
          %s425 = int_to_ptr.vmem [resolvable:$true] %s424
          %s426 = sshll.u32 %s422, 4
          %s427 = int_to_ptr.hbm [resolvable:$true] %s426
          %429 = dma.vmem_to_hbm [thread:$0]  %s425, 128, %s427, %s412
        $region52: #{tpu_custom_call.1} parent=35 // pred_fallthru
          _
      $region36: #{tpu_custom_call.1} parent=5 // pred_fallthru
        _
      %p430 = scmp.le.s32.totalorder 2, %s18
      // Predicated region
      $region53: #{tpu_custom_call.1} parent=5 // pred_check
        %p431 = pneg %p430
      $region54: #{tpu_custom_call.1} parent=5 // pred_check_branch
        %433 = sbr.rel (%p431) target = $region56
      $region55: #{tpu_custom_call.1} parent=5 // pred_region
        %s434 = ssub.s32 %s18, 2
        // Predicated region
        $region57: #{tpu_custom_call.1} parent=55 // pred_check
          %p435 = pneg %p150
        $region58: #{tpu_custom_call.1} parent=55 // pred_check_branch
          %437 = sbr.rel (%p435) target = $region60
        $region59: #{tpu_custom_call.1} parent=55 // pred_region
          %s438 = sand.u32 %s135, 1
          %s439 = scalar_lea.sflag [#allocation6], %s438
          %s440 = sand.u32 %s135, 1
          %s441 = smul.addr %s440, 8
          %s442 = scalar_lea.vmem [#allocation7], %s441
          %444 = dma.done %s439, 128
        $region60: #{tpu_custom_call.1} parent=55 // pred_fallthru
          _
      $region56: #{tpu_custom_call.1} parent=5 // pred_fallthru
        _
    $region6: #{tpu_custom_call.1} parent=1 // loop_footer
      %s22 = sadd.s32 1, %s18
    $region7: #{tpu_custom_call.1} parent=1 // loop_footer_branch
      %17 = sbr.rel target = $region3
    $region8: #{tpu_custom_call.1} parent=1 // loop_exit
      _
    %445 = vsyncpa [#allocation5], 1
    %s446 = scalar_lea.sflag [#allocation5], 1
    %447 = vsyncpa %s446, 1
    %448 = vsyncpa [#allocation6], 1
    %s449 = scalar_lea.sflag [#allocation6], 1
    %450 = vsyncpa %s449, 1

</llo_original>
